<compile_context>
chip_gen: v5e
topology: v5e:2x2
jax: 0.10.0
libtpu: 0.0.40
codegen_flags: <defaults>
</compile_context>

<pallas_src>
import jax
import jax.numpy as jnp
from jax import lax
from jax.experimental import pallas as pl
from jax.experimental.pallas import tpu as pltpu

LN_EPS = 1e-5
_INV_SQRT2 = 0.7071067811865476


def _round_up(n, m):
    return ((n + m - 1) // m) * m


def _demo_block_kernel(x_ref, gamma_ref, beta_ref, w1t_ref, w2t_ref, o_ref):
    # x_ref: (TILE, F)   gamma/beta: (1, F)   w1t/w2t: (F, F), pre-transposed   o_ref: (TILE, F)
    x = x_ref[...].astype(jnp.float32)

    # --- LayerNorm over last dim (biased variance, matches torch.nn.LayerNorm) ---
    mean = jnp.mean(x, axis=-1, keepdims=True)
    xc = x - mean
    var = jnp.mean(xc * xc, axis=-1, keepdims=True)
    xn = xc * lax.rsqrt(var + LN_EPS)
    xn = xn * gamma_ref[...].astype(jnp.float32) + beta_ref[...].astype(jnp.float32)

    # --- f1: y = x @ W1^T ; W1^T was pre-transposed in the wrapper (no in-kernel .T) ---
    h = jnp.dot(xn.astype(w1t_ref.dtype), w1t_ref[...],
                preferred_element_type=jnp.float32)

    # --- GELU (exact erf form, matches nn.GELU() default); lowers to the EUP slot ---
    h = 0.5 * h * (1.0 + lax.erf(h * _INV_SQRT2))

    # --- f2: y = h @ W2^T (pre-transposed) ---
    y = jnp.dot(h.astype(w2t_ref.dtype), w2t_ref[...],
                preferred_element_type=jnp.float32)

    # --- residual add: re-read x from the VMEM-resident input tile (keeps live ranges small) ---
    o_ref[...] = (x_ref[...].astype(jnp.float32) + y).astype(o_ref.dtype)


def demo_block(x, ln_gamma, ln_beta, w1, w2, *, row_tile=256,
               matmul_dtype=jnp.float32, vmem_limit_bytes=48 * 1024 * 1024):
    """x: (B, S, F). ln_gamma/ln_beta: (F,). w1/w2: (F, F) in PyTorch Linear layout (out, in)."""
    B, S, F = x.shape
    tokens = B * S

    # Row tile: multiple of 8 (f32 sublane), capped to the (8-rounded) token count.
    row_tile = max(8, (row_tile // 8) * 8)
    row_tile = min(row_tile, _round_up(tokens, 8))
    tokens_pad = _round_up(tokens, row_tile)

    x2d = x.reshape(tokens, F)
    if tokens_pad != tokens:
        x2d = jnp.pad(x2d, ((0, tokens_pad - tokens), (0, 0)))

    gamma2d = ln_gamma.reshape(1, F)
    beta2d = ln_beta.reshape(1, F)

    # Hoist the loop-invariant weight transposes out of the kernel; optionally cast to bf16
    # for the MXU (accumulation stays f32 inside the kernel).
    w1t = jnp.asarray(w1.T, dtype=matmul_dtype)
    w2t = jnp.asarray(w2.T, dtype=matmul_dtype)

    out2d = pl.pallas_call(
        _demo_block_kernel,
        out_shape=jax.ShapeDtypeStruct((tokens_pad, F), x.dtype),
        grid_spec=pltpu.PrefetchScalarGridSpec(
            num_scalar_prefetch=0,
            grid=(tokens_pad // row_tile,),
            in_specs=[
                pl.BlockSpec((row_tile, F), lambda i: (i, 0)),  # x tile
                pl.BlockSpec((1, F), lambda i: (0, 0)),         # gamma (loop-invariant)
                pl.BlockSpec((1, F), lambda i: (0, 0)),         # beta  (loop-invariant)
                pl.BlockSpec((F, F), lambda i: (0, 0)),         # W1^T  (loop-invariant)
                pl.BlockSpec((F, F), lambda i: (0, 0)),         # W2^T  (loop-invariant)
            ],
            out_specs=pl.BlockSpec((row_tile, F), lambda i: (i, 0)),
        ),
        compiler_params=pltpu.CompilerParams(
            dimension_semantics=("parallel",),
            vmem_limit_bytes=vmem_limit_bytes,
        ),
    )(x2d, gamma2d, beta2d, w1t, w2t)

    if tokens_pad != tokens:
        out2d = out2d[:tokens]
    return out2d.reshape(B, S, F)


def _reference(x, ln_gamma, ln_beta, w1, w2):
    mean = jnp.mean(x, axis=-1, keepdims=True)
    var = jnp.mean((x - mean) ** 2, axis=-1, keepdims=True)
    xn = (x - mean) * lax.rsqrt(var + LN_EPS) * ln_gamma + ln_beta
    h = xn @ w1.T
    h = 0.5 * h * (1.0 + lax.erf(h / jnp.sqrt(2.0)))
    y = h @ w2.T
    return x + y


if __name__ == "__main__":
    FEAT = 32
    B, S = 2, 8

    key = jax.random.PRNGKey(0)
    kx, kg, kb, k1, k2 = jax.random.split(key, 5)

    x = jax.random.normal(kx, (B, S, FEAT), dtype=jnp.float32)
    # Deterministic "trained-looking" params (LayerNorm affine + two Linear weights).
    ln_gamma = 1.0 + 0.1 * jax.random.normal(kg, (FEAT,), dtype=jnp.float32)
    ln_beta = 0.1 * jax.random.normal(kb, (FEAT,), dtype=jnp.float32)
    w1 = jax.random.normal(k1, (FEAT, FEAT), dtype=jnp.float32) / jnp.sqrt(FEAT)
    w2 = jax.random.normal(k2, (FEAT, FEAT), dtype=jnp.float32) / jnp.sqrt(FEAT)

    ref = _reference(x, ln_gamma, ln_beta, w1, w2)

    # f32 matmul path: matches the PyTorch module semantics to tight tolerance.
    out = demo_block(x, ln_gamma, ln_beta, w1, w2)
    jax.block_until_ready(out)
    assert out.shape == (B, S, FEAT)
    assert jnp.allclose(out, ref, atol=1e-4, rtol=1e-4)

    # bf16 matmul path (v6e/v7x MXU optimization, f32 accumulation): looser sanity check.
    out_bf16 = demo_block(x, ln_gamma, ln_beta, w1, w2, matmul_dtype=jnp.bfloat16)
    jax.block_until_ready(out_bf16)
    assert jnp.max(jnp.abs(out_bf16 - ref)) < 0.15

    print("KERNEL_OK")
</pallas_src>

<mosaic_0001>
module attributes {stable_mosaic.version = 11 : i64} {
  func.func @_demo_block_kernel(%arg0: i32, %arg1: memref<16x32xf32, #tpu.memory_space<vmem>>, %arg2: memref<1x32xf32, #tpu.memory_space<vmem>>, %arg3: memref<1x32xf32, #tpu.memory_space<vmem>>, %arg4: memref<32x32xf32, #tpu.memory_space<vmem>>, %arg5: memref<32x32xf32, #tpu.memory_space<vmem>>, %arg6: memref<16x32xf32, #tpu.memory_space<vmem>>) attributes {dimension_semantics = [#tpu.dimension_semantics<parallel>], iteration_bounds = array<i64: 1>, scalar_prefetch = 0 : i64, scratch_operands = 0 : i64, tpu.core_type = #tpu.core_type<tc>, window_params = [{transform_indices = @transform_0, window_bounds = array<i64: 16, 32>}, {pipeline_mode = #tpu.pipeline_mode<synchronous>, transform_indices = @transform_1, window_bounds = array<i64: 1, 32>}, {pipeline_mode = #tpu.pipeline_mode<synchronous>, transform_indices = @transform_2, window_bounds = array<i64: 1, 32>}, {pipeline_mode = #tpu.pipeline_mode<synchronous>, transform_indices = @transform_3, window_bounds = array<i64: 32, 32>}, {pipeline_mode = #tpu.pipeline_mode<synchronous>, transform_indices = @transform_4, window_bounds = array<i64: 32, 32>}, {transform_indices = @transform_5, window_bounds = array<i64: 16, 32>}]} {
    %c0 = arith.constant 0 : index
    %c0_0 = arith.constant 0 : index
    %0 = vector.load %arg1[%c0, %c0_0] : memref<16x32xf32, #tpu.memory_space<vmem>>, vector<16x32xf32>
    %cst = arith.constant dense<0.000000e+00> : vector<16xf32>
    %1 = vector.multi_reduction <add>, %0, %cst [1] : vector<16x32xf32> to vector<16xf32>
    %2 = vector.shape_cast %1 : vector<16xf32> to vector<16x1xf32>
    %cst_1 = arith.constant 3.200000e+01 : f32
    %3 = vector.broadcast %cst_1 : f32 to vector<16x1xf32>
    %4 = arith.divf %2, %3 : vector<16x1xf32>
    %5 = vector.broadcast %4 : vector<16x1xf32> to vector<16x32xf32>
    %6 = arith.subf %0, %5 : vector<16x32xf32>
    %7 = arith.mulf %6, %6 : vector<16x32xf32>
    %cst_2 = arith.constant dense<0.000000e+00> : vector<16xf32>
    %8 = vector.multi_reduction <add>, %7, %cst_2 [1] : vector<16x32xf32> to vector<16xf32>
    %9 = vector.shape_cast %8 : vector<16xf32> to vector<16x1xf32>
    %cst_3 = arith.constant 3.200000e+01 : f32
    %10 = vector.broadcast %cst_3 : f32 to vector<16x1xf32>
    %11 = arith.divf %9, %10 : vector<16x1xf32>
    %cst_4 = arith.constant 9.99999974E-6 : f32
    %12 = vector.broadcast %cst_4 : f32 to vector<16x1xf32>
    %13 = arith.addf %11, %12 : vector<16x1xf32>
    %14 = math.rsqrt %13 : vector<16x1xf32>
    %15 = vector.broadcast %14 : vector<16x1xf32> to vector<16x32xf32>
    %16 = arith.mulf %6, %15 : vector<16x32xf32>
    %c0_5 = arith.constant 0 : index
    %c0_6 = arith.constant 0 : index
    %17 = vector.load %arg2[%c0_5, %c0_6] : memref<1x32xf32, #tpu.memory_space<vmem>>, vector<1x32xf32>
    %18 = vector.broadcast %17 : vector<1x32xf32> to vector<16x32xf32>
    %19 = arith.mulf %16, %18 : vector<16x32xf32>
    %c0_7 = arith.constant 0 : index
    %c0_8 = arith.constant 0 : index
    %20 = vector.load %arg3[%c0_7, %c0_8] : memref<1x32xf32, #tpu.memory_space<vmem>>, vector<1x32xf32>
    %21 = vector.broadcast %20 : vector<1x32xf32> to vector<16x32xf32>
    %22 = arith.addf %19, %21 : vector<16x32xf32>
    %c0_9 = arith.constant 0 : index
    %c0_10 = arith.constant 0 : index
    %23 = vector.load %arg4[%c0_9, %c0_10] : memref<32x32xf32, #tpu.memory_space<vmem>>, vector<32x32xf32>
    %cst_11 = arith.constant dense<0.000000e+00> : vector<16x32xf32>
    %24 = tpu.matmul %22, %23, %cst_11 {dimension_numbers = #tpu.dot_dimension_numbers<[1], [0], [0], [1], [0, 0, 1, 1], [], []>} : vector<16x32xf32>, vector<32x32xf32>, vector<16x32xf32> -> vector<16x32xf32>
    %cst_12 = arith.constant 5.000000e-01 : f32
    %25 = vector.broadcast %cst_12 : f32 to vector<16x32xf32>
    %26 = arith.mulf %25, %24 : vector<16x32xf32>
    %cst_13 = arith.constant 0.707106769 : f32
    %27 = vector.broadcast %cst_13 : f32 to vector<16x32xf32>
    %28 = arith.mulf %24, %27 : vector<16x32xf32>
    %29 = math.erf %28 : vector<16x32xf32>
    %cst_14 = arith.constant 1.000000e+00 : f32
    %30 = vector.broadcast %cst_14 : f32 to vector<16x32xf32>
    %31 = arith.addf %30, %29 : vector<16x32xf32>
    %32 = arith.mulf %26, %31 : vector<16x32xf32>
    %c0_15 = arith.constant 0 : index
    %c0_16 = arith.constant 0 : index
    %33 = vector.load %arg5[%c0_15, %c0_16] : memref<32x32xf32, #tpu.memory_space<vmem>>, vector<32x32xf32>
    %cst_17 = arith.constant dense<0.000000e+00> : vector<16x32xf32>
    %34 = tpu.matmul %32, %33, %cst_17 {dimension_numbers = #tpu.dot_dimension_numbers<[1], [0], [0], [1], [0, 0, 1, 1], [], []>} : vector<16x32xf32>, vector<32x32xf32>, vector<16x32xf32> -> vector<16x32xf32>
    %c0_18 = arith.constant 0 : index
    %c0_19 = arith.constant 0 : index
    %35 = vector.load %arg1[%c0_18, %c0_19] : memref<16x32xf32, #tpu.memory_space<vmem>>, vector<16x32xf32>
    %36 = arith.addf %35, %34 : vector<16x32xf32>
    %c0_20 = arith.constant 0 : index
    %c0_21 = arith.constant 0 : index
    %37 = vector.load %arg6[%c0_20, %c0_21] : memref<16x32xf32, #tpu.memory_space<vmem>>, vector<16x32xf32>
    tpu.vector_store %arg6[%c0_20, %c0_21], %36 {strides = array<i32>} : memref<16x32xf32, #tpu.memory_space<vmem>>, vector<16x32xf32>,
    return
  }
  func.func @transform_0(%arg0: i32) -> (i32, i32) {
    %c0_i32 = arith.constant 0 : i32
    %c0_i32_0 = arith.constant 0 : i32
    return %arg0, %c0_i32 : i32, i32
  }
  func.func @transform_1(%arg0: i32) -> (i32, i32) {
    %c0_i32 = arith.constant 0 : i32
    %c0_i32_0 = arith.constant 0 : i32
    %c0_i32_1 = arith.constant 0 : i32
    return %c0_i32, %c0_i32_0 : i32, i32
  }
  func.func @transform_2(%arg0: i32) -> (i32, i32) {
    %c0_i32 = arith.constant 0 : i32
    %c0_i32_0 = arith.constant 0 : i32
    %c0_i32_1 = arith.constant 0 : i32
    return %c0_i32, %c0_i32_0 : i32, i32
  }
  func.func @transform_3(%arg0: i32) -> (i32, i32) {
    %c0_i32 = arith.constant 0 : i32
    %c0_i32_0 = arith.constant 0 : i32
    %c0_i32_1 = arith.constant 0 : i32
    return %c0_i32, %c0_i32_0 : i32, i32
  }
  func.func @transform_4(%arg0: i32) -> (i32, i32) {
    %c0_i32 = arith.constant 0 : i32
    %c0_i32_0 = arith.constant 0 : i32
    %c0_i32_1 = arith.constant 0 : i32
    return %c0_i32, %c0_i32_0 : i32, i32
  }
  func.func @transform_5(%arg0: i32) -> (i32, i32) {
    %c0_i32 = arith.constant 0 : i32
    %c0_i32_0 = arith.constant 0 : i32
    return %arg0, %c0_i32 : i32, i32
  }
}

</mosaic_0001>

<llo_original>
// kernel: tpu_custom_call.1
$region0: #{tpu_custom_call.1}
  #allocation0 [shape = 'u32[]', space=smem, size = 0x4, offset = 0x4, fixed_abs, tag = 'smem constant byte address 0x4 - core index']
  #allocation1 [shape = 'u32[72,128]{1,0:T(1,128)}', space=vmem, size = 0x9000, scoped, tag = 'internal scratch']
  %s0 = inlined_call_operand.hbm [shape: f32[16,32], index: 0, kind: input, shape index: {}]
  %s1 = inlined_call_operand.hbm [shape: f32[1,32], index: 1, kind: input, shape index: {}]
  %s2 = inlined_call_operand.vmem [shape: f32[1,32], index: 2, kind: input, shape index: {}]
  %s3 = inlined_call_operand.hbm [shape: f32[32,32], index: 3, kind: input, shape index: {}]
  %s4 = inlined_call_operand.hbm [shape: f32[32,32], index: 4, kind: input, shape index: {}]
  %s5 = inlined_call_operand.hbm [shape: f32[16,32], index: 5, kind: output, shape index: {}]
  %s6 = sld [smem:[#allocation0]]
  $region46: #{tpu_custom_call.1} parent=0
    _
  %s8 = ssub.s32 1, %s6
  %s9 = scalar_select 0, %s8, %s6
  $region1: #{tpu_custom_call.1} parent=0
    #allocation2 [shape = 'u8[8192]{0}', space=vmem, size = 0x2000, scoped, tag = 'input window, operand 0, single buffered']
    #allocation3 [shape = 's32[1]{0}', space=sflag, size = 0x4, scoped, tag = 'scoped memory for tpu_custom_call.1']
    #allocation4 [shape = 's32[1]{0}', space=sflag, size = 0x4, scoped, tag = 'scoped memory for tpu_custom_call.1']
    #allocation5 [shape = 'u8[512]{0}', space=vmem, size = 0x400, scoped, tag = 'input window, operand 1, single buffered']
    #allocation6 [shape = 's32[1]{0}', space=sflag, size = 0x4, scoped, tag = 'scoped memory for tpu_custom_call.1']
    #allocation7 [shape = 'u8[16384]{0}', space=vmem, size = 0x4000, scoped, tag = 'input window, operand 3, single buffered']
    #allocation8 [shape = 'u8[16384]{0}', space=vmem, size = 0x4000, scoped, tag = 'input window, operand 4, single buffered']
    #allocation9 [shape = 's32[1]{0}', space=sflag, size = 0x4, scoped, tag = 'scoped memory for tpu_custom_call.1']
    #allocation10 [shape = 'u8[8192]{0}', space=vmem, size = 0x2000, scoped, tag = 'output window, operand 0, single buffered']
    %10 = vsyncpa [#allocation3], 0
    %11 = vsyncpa [#allocation6], 0
    %12 = vsyncpa [#allocation9], 0
    %13 = vsyncpa [#allocation4], 0
    // Predicated region
    $region2: #{tpu_custom_call.1} parent=1 // pred_check
      _
    $region3: #{tpu_custom_call.1} parent=1 // pred_check_branch
      %15 = sbr.rel (0) target = $region5
    $region4: #{tpu_custom_call.1} parent=1 // pred_region
      %17 = vsyncadd [#allocation3], 0
      %s18 = sshll.u32 %s0, 4
      %s19 = int_to_ptr.hbm [resolvable:$true] %s18
      %s20 = sshll.u32 [#allocation2], 4
      %s21 = int_to_ptr.vmem [resolvable:$true] %s20
      %26 = dma.hbm_to_vmem [thread:$0]  %s19, 256, %s21, [#allocation3], 128, 128, 8
    $region5: #{tpu_custom_call.1} parent=1 // pred_fallthru
      _
    // Predicated region
    $region6: #{tpu_custom_call.1} parent=1 // pred_check
      _
    $region7: #{tpu_custom_call.1} parent=1 // pred_check_branch
      %28 = sbr.rel (0) target = $region9
    $region8: #{tpu_custom_call.1} parent=1 // pred_region
      %30 = vsyncadd [#allocation6], 0
      %s32 = sshll.u32 %s1, 4
      %s33 = int_to_ptr.hbm [resolvable:$true] %s32
      %s34 = sshll.u32 [#allocation5], 4
      %s35 = int_to_ptr.vmem [resolvable:$true] %s34
      %37 = dma.hbm_to_vmem [thread:$0]  %s33, 16, %s35, [#allocation6]
    $region9: #{tpu_custom_call.1} parent=1 // pred_fallthru
      _
    // Predicated region
    $region10: #{tpu_custom_call.1} parent=1 // pred_check
      _
    $region11: #{tpu_custom_call.1} parent=1 // pred_check_branch
      %39 = sbr.rel (0) target = $region13
    $region12: #{tpu_custom_call.1} parent=1 // pred_region
      _
    $region13: #{tpu_custom_call.1} parent=1 // pred_fallthru
      _
    // Predicated region
    $region14: #{tpu_custom_call.1} parent=1 // pred_check
      _
    $region15: #{tpu_custom_call.1} parent=1 // pred_check_branch
      %41 = sbr.rel (0) target = $region17
    $region16: #{tpu_custom_call.1} parent=1 // pred_region
      %43 = vsyncadd [#allocation6], 0
      %s44 = sshll.u32 %s3, 4
      %s45 = int_to_ptr.hbm [resolvable:$true] %s44
      %s46 = sshll.u32 [#allocation7], 4
      %s47 = int_to_ptr.vmem [resolvable:$true] %s46
      %52 = dma.hbm_to_vmem [thread:$0]  %s45, 512, %s47, [#allocation6], 128, 128, 8
    $region17: #{tpu_custom_call.1} parent=1 // pred_fallthru
      _
    // Predicated region
    $region18: #{tpu_custom_call.1} parent=1 // pred_check
      _
    $region19: #{tpu_custom_call.1} parent=1 // pred_check_branch
      %54 = sbr.rel (0) target = $region21
    $region20: #{tpu_custom_call.1} parent=1 // pred_region
      %56 = vsyncadd [#allocation9], 0
      %s57 = sshll.u32 %s4, 4
      %s58 = int_to_ptr.hbm [resolvable:$true] %s57
      %s59 = sshll.u32 [#allocation8], 4
      %s60 = int_to_ptr.vmem [resolvable:$true] %s59
      %65 = dma.hbm_to_vmem [thread:$0]  %s58, 512, %s60, [#allocation9], 128, 128, 8
    $region21: #{tpu_custom_call.1} parent=1 // pred_fallthru
      _
    // Predicated region
    $region22: #{tpu_custom_call.1} parent=1 // pred_check
      _
    $region23: #{tpu_custom_call.1} parent=1 // pred_check_branch
      %67 = sbr.rel (0) target = $region25
    $region24: #{tpu_custom_call.1} parent=1 // pred_region
      %69 = dma.done [#allocation3], 256
    $region25: #{tpu_custom_call.1} parent=1 // pred_fallthru
      _
    // Predicated region
    $region26: #{tpu_custom_call.1} parent=1 // pred_check
      _
    $region27: #{tpu_custom_call.1} parent=1 // pred_check_branch
      %71 = sbr.rel (0) target = $region29
    $region28: #{tpu_custom_call.1} parent=1 // pred_region
      %73 = dma.done [#allocation6], 16
    $region29: #{tpu_custom_call.1} parent=1 // pred_fallthru
      _
    // Predicated region
    $region30: #{tpu_custom_call.1} parent=1 // pred_check
      _
    $region31: #{tpu_custom_call.1} parent=1 // pred_check_branch
      %75 = sbr.rel (0) target = $region33
    $region32: #{tpu_custom_call.1} parent=1 // pred_region
      %77 = dma.done [#allocation6], 512
    $region33: #{tpu_custom_call.1} parent=1 // pred_fallthru
      _
    // Predicated region
    $region34: #{tpu_custom_call.1} parent=1 // pred_check
      _
    $region35: #{tpu_custom_call.1} parent=1 // pred_check_branch
      %79 = sbr.rel (0) target = $region37
    $region36: #{tpu_custom_call.1} parent=1 // pred_region
      %81 = dma.done [#allocation9], 512
    $region37: #{tpu_custom_call.1} parent=1 // pred_fallthru
      _
    %v82 = vld [vmem:[#allocation2] sm:$0xff]
    %v83 = vld [vmem:[#allocation2 + $0x8] sm:$0xff]
    %vm84 = vcmask 261120
    %v85 = vsel %vm84, %v82, 0.0
    %86 = vadd.xlane.f32.xlu0 %v85
    %v87 = vpop.xlane.xlu0 %86
    %v88 = vsel %vm84, %v83, 0.0
    %89 = vadd.xlane.f32.xlu0 %v88
    %v90 = vpop.xlane.xlu0 %89
    %v91 = vrcp.pop 32.0
    %v92 = vmul.f32 32.0, %v91
    %v93 = vsub.f32 1.0, %v92
    %v94 = vmul.f32 %v91, %v93
    %v95 = vadd.f32 %v91, %v94
    %vm96 = vweird.f32 %v91
    %v97 = vsel %vm96, %v91, %v95
    %v98 = vmul.f32 %v87, %v97
    %v99 = vmul.f32 %v90, %v97
    %v100 = vsub.f32 %v82, %v98
    %v101 = vsub.f32 %v83, %v99
    %v102 = vmul.f32 %v100, %v100
    %v103 = vmul.f32 %v101, %v101
    %v104 = vsel %vm84, %v102, 0.0
    %105 = vadd.xlane.f32.xlu0 %v104
    %v106 = vpop.xlane.xlu0 %105
    %v107 = vsel %vm84, %v103, 0.0
    %108 = vadd.xlane.f32.xlu0 %v107
    %v109 = vpop.xlane.xlu0 %108
    %v110 = vmul.f32 %v106, %v97
    %v111 = vmul.f32 %v109, %v97
    %v112 = vadd.f32 %v110, 1e-05
    %v113 = vadd.f32 %v111, 1e-05
    %v114 = vrsqrt.pop %v112
    %v115 = vmul.f32 %v114, %v112
    %v116 = vmul.f32 %v115, %v114
    %v117 = vmul.f32 0.5, %v116
    %v118 = vsub.f32 1.5, %v117
    %v119 = vmul.f32 %v114, %v118
    %vm120 = vweird.f32 %v112
    %vm121 = vweird.f32 %v114
    %vm122 = vmor %vm120, %vm121
    %v123 = vsel %vm122, %v114, %v119
    %v124 = vrsqrt.pop %v113
    %v125 = vmul.f32 %v124, %v113
    %v126 = vmul.f32 %v125, %v124
    %v127 = vmul.f32 0.5, %v126
    %v128 = vsub.f32 1.5, %v127
    %v129 = vmul.f32 %v124, %v128
    %vm130 = vweird.f32 %v113
    %vm131 = vweird.f32 %v124
    %vm132 = vmor %vm130, %vm131
    %v133 = vsel %vm132, %v124, %v129
    %v134 = vmul.f32 %v100, %v123
    %v135 = vmul.f32 %v101, %v133
    %v136 = vld [vmem:[#allocation5] sm:$0x1]
    %v138 = vperm.slane %v136, 0
    %v140 = vmul.f32 %v134, %v138
    %v141 = vmul.f32 %v135, %v138
    %v142 = vld [vmem:[%s2] sm:$0x1]
    %v144 = vperm.slane %v142, 0
    %v146 = vadd.f32 %v140, %v144
    %v147 = vadd.f32 %v141, %v144
    %v148 = vld [vmem:[#allocation7] sm:$0xff]
    %v149 = vld [vmem:[#allocation7 + $0x8] sm:$0xff]
    %v150 = vld [vmem:[#allocation7 + $0x10] sm:$0xff]
    %v151 = vld [vmem:[#allocation7 + $0x18] sm:$0xff]
    %v153 = vsel %vm84, %v146, 0
    %v156 = vsel %vm84, %v147, 0
    %158 = vmatpush.msra.mxu0 0.0
    %159 = vmatpush.msra.mxu0 0.0
    %160 = vmatpush.msra.mxu0 0.0
    %161 = vmatpush.msra.mxu0 0.0
    %162 = vmatpush.msra.mxu0 0.0
    %163 = vmatpush.msra.mxu0 0.0
    %164 = vmatpush.msra.mxu0 0.0
    %165 = vmatpush.msra.mxu0 0.0
    %166 = vmatpush.msra.mxu0 0.0
    %167 = vmatpush.msra.mxu0 0.0
    %168 = vmatpush.msra.mxu0 0.0
    %169 = vmatpush.msra.mxu0 0.0
    %170 = vmatpush.msra.mxu0 %v151
    %171 = vmatpush.msra.mxu0 %v150
    %172 = vmatpush.msra.mxu0 %v149
    %173 = vmatpush.msra.mxu0 %v148
    %174 = vmatmul.f32.gmra.mxu0 %v153
    %v175 = vpop.f32.mrf.mxu0
    %v176 = vadd.f32 0.0, %v175
    %177 = vmatmul.f32.gmra.mxu0 %v156
    %v178 = vpop.f32.mrf.mxu0
    %v179 = vadd.f32 0.0, %v178
    %180 = vdwg.mxu0
    %v181 = vmul.f32 %v176, 0.5
    %v182 = vmul.f32 %v179, 0.5
    %v183 = vmul.f32 %v176, 0.70710677
    %v184 = vmul.f32 %v179, 0.70710677
    %v185 = vmul.f32 %v183, %v183
    %v186 = vmin.f32 16.0, %v185
    %v187 = vmul.f32 %v186, 2.1237322e-06
    %v188 = vadd.f32 %v187, 0.00028619796
    %v189 = vmul.f32 %v186, %v188
    %v190 = vadd.f32 %v189, 0.0036580483
    %v191 = vmul.f32 %v186, %v190
    %v192 = vadd.f32 %v191, 0.05243302
    %v193 = vmul.f32 %v186, %v192
    %v194 = vadd.f32 %v193, 0.18741608
    %v195 = vmul.f32 %v186, %v194
    %v196 = vadd.f32 %v195, 1.1283791
    %v197 = vmul.f32 %v183, %v196
    %v198 = vmul.f32 %v186, 3.8918573e-05
    %v199 = vadd.f32 %v198, 0.001143296
    %v200 = vmul.f32 %v186, %v199
    %v201 = vadd.f32 %v200, 0.014752088
    %v202 = vmul.f32 %v186, %v201
    %v203 = vadd.f32 %v202, 0.112945676
    %v204 = vmul.f32 %v186, %v203
    %v205 = vadd.f32 %v204, 0.4994258
    %v206 = vmul.f32 %v186, %v205
    %v207 = vadd.f32 %v206, 1.0
    %v208 = vrcp.pop %v207
    %v209 = vmul.f32 %v207, %v208
    %v210 = vsub.f32 1.0, %v209
    %v211 = vmul.f32 %v208, %v210
    %v212 = vadd.f32 %v208, %v211
    %vm213 = vweird.f32 %v207
    %vm214 = vweird.f32 %v208
    %vm215 = vmor %vm213, %vm214
    %v216 = vsel %vm215, %v208, %v212
    %v217 = vand.u32 2147483647, %v207
    %vm218 = vcmp.eq.f32.partialorder %v217, 8.507059e+37
    %v219 = vand.u32 %v207, 2147483648
    %v220 = vor.u32 1.1754944e-38, %v219
    %v221 = vsel %vm218, %v220, %v216
    %v222 = vmul.f32 %v197, %v221
    %v223 = vmin.f32 %v222, 1.0
    %v224 = vmax.f32 %v223, -1.0
    %v225 = vmul.f32 %v184, %v184
    %v226 = vmin.f32 16.0, %v225
    %v227 = vmul.f32 %v226, 2.1237322e-06
    %v228 = vadd.f32 %v227, 0.00028619796
    %v229 = vmul.f32 %v226, %v228
    %v230 = vadd.f32 %v229, 0.0036580483
    %v231 = vmul.f32 %v226, %v230
    %v232 = vadd.f32 %v231, 0.05243302
    %v233 = vmul.f32 %v226, %v232
    %v234 = vadd.f32 %v233, 0.18741608
    %v235 = vmul.f32 %v226, %v234
    %v236 = vadd.f32 %v235, 1.1283791
    %v237 = vmul.f32 %v184, %v236
    %v238 = vmul.f32 %v226, 3.8918573e-05
    %v239 = vadd.f32 %v238, 0.001143296
    %v240 = vmul.f32 %v226, %v239
    %v241 = vadd.f32 %v240, 0.014752088
    %v242 = vmul.f32 %v226, %v241
    %v243 = vadd.f32 %v242, 0.112945676
    %v244 = vmul.f32 %v226, %v243
    %v245 = vadd.f32 %v244, 0.4994258
    %v246 = vmul.f32 %v226, %v245
    %v247 = vadd.f32 %v246, 1.0
    %v248 = vrcp.pop %v247
    %v249 = vmul.f32 %v247, %v248
    %v250 = vsub.f32 1.0, %v249
    %v251 = vmul.f32 %v248, %v250
    %v252 = vadd.f32 %v248, %v251
    %vm253 = vweird.f32 %v247
    %vm254 = vweird.f32 %v248
    %vm255 = vmor %vm253, %vm254
    %v256 = vsel %vm255, %v248, %v252
    %v257 = vand.u32 2147483647, %v247
    %vm258 = vcmp.eq.f32.partialorder %v257, 8.507059e+37
    %v259 = vand.u32 %v247, 2147483648
    %v260 = vor.u32 1.1754944e-38, %v259
    %v261 = vsel %vm258, %v260, %v256
    %v262 = vmul.f32 %v237, %v261
    %v263 = vmin.f32 %v262, 1.0
    %v264 = vmax.f32 %v263, -1.0
    %v265 = vadd.f32 %v224, 1.0
    %v266 = vadd.f32 %v264, 1.0
    %v267 = vmul.f32 %v181, %v265
    %v268 = vmul.f32 %v182, %v266
    %v269 = vld [vmem:[#allocation8] sm:$0xff]
    %v270 = vld [vmem:[#allocation8 + $0x8] sm:$0xff]
    %v271 = vld [vmem:[#allocation8 + $0x10] sm:$0xff]
    %v272 = vld [vmem:[#allocation8 + $0x18] sm:$0xff]
    %v274 = vsel %vm84, %v267, 0
    %v277 = vsel %vm84, %v268, 0
    %279 = vmatpush.msra.mxu0 0.0
    %280 = vmatpush.msra.mxu0 0.0
    %281 = vmatpush.msra.mxu0 0.0
    %282 = vmatpush.msra.mxu0 0.0
    %283 = vmatpush.msra.mxu0 0.0
    %284 = vmatpush.msra.mxu0 0.0
    %285 = vmatpush.msra.mxu0 0.0
    %286 = vmatpush.msra.mxu0 0.0
    %287 = vmatpush.msra.mxu0 0.0
    %288 = vmatpush.msra.mxu0 0.0
    %289 = vmatpush.msra.mxu0 0.0
    %290 = vmatpush.msra.mxu0 0.0
    %291 = vmatpush.msra.mxu0 %v272
    %292 = vmatpush.msra.mxu0 %v271
    %293 = vmatpush.msra.mxu0 %v270
    %294 = vmatpush.msra.mxu0 %v269
    %295 = vmatmul.f32.gmra.mxu0 %v274
    %v296 = vpop.f32.mrf.mxu0
    %v297 = vadd.f32 0.0, %v296
    %298 = vmatmul.f32.gmra.mxu0 %v277
    %v299 = vpop.f32.mrf.mxu0
    %v300 = vadd.f32 0.0, %v299
    %301 = vdwg.mxu0
    %v302 = vadd.f32 %v82, %v297
    %v303 = vadd.f32 %v83, %v300
    %304 = vst.msk [vmem:[#allocation10] sm:$0xff] %vm84, %v302
    %305 = vst.msk [vmem:[#allocation10 + $0x8] sm:$0xff] %vm84, %v303
    // Predicated region
    $region38: #{tpu_custom_call.1} parent=1 // pred_check
      _
    $region39: #{tpu_custom_call.1} parent=1 // pred_check_branch
      %307 = sbr.rel (0) target = $region41
    $region40: #{tpu_custom_call.1} parent=1 // pred_region
      %309 = vsyncadd [#allocation4], 0
      %s310 = sshll.u32 [#allocation10], 4
      %s311 = int_to_ptr.vmem [resolvable:$true] %s310
      %s312 = sshll.u32 %s5, 4
      %s313 = int_to_ptr.hbm [resolvable:$true] %s312
      %318 = dma.vmem_to_hbm [thread:$0]  %s311, 256, %s313, [#allocation4], 128, 128, 8
    $region41: #{tpu_custom_call.1} parent=1 // pred_fallthru
      _
    // Predicated region
    $region42: #{tpu_custom_call.1} parent=1 // pred_check
      _
    $region43: #{tpu_custom_call.1} parent=1 // pred_check_branch
      %320 = sbr.rel (0) target = $region45
    $region44: #{tpu_custom_call.1} parent=1 // pred_region
      %322 = dma.done [#allocation4], 256
    $region45: #{tpu_custom_call.1} parent=1 // pred_fallthru
      _
    %323 = vsyncpa [#allocation3], 1
    %324 = vsyncpa [#allocation6], 1
    %325 = vsyncpa [#allocation9], 1
    %326 = vsyncpa [#allocation4], 1

</llo_original>
